<compile_context>
chip_gen: v7x
topology: tpu7x:2x2x1
jax: 0.10.0
libtpu: 0.0.40
codegen_flags: <defaults>
</compile_context>

<pallas_src>
import math

import jax
import jax.numpy as jnp
from jax.experimental import pallas as pl
from jax.experimental.pallas import tpu as pltpu

_LANE = 128
_SUBLANE = 8


def _cdiv(a, b):
    return -(-a // b)


def _round_up(x, m):
    return _cdiv(x, m) * m


def _vmem_plan():
    """(vmem_limit_bytes, tile_budget_bytes), sized per TPU generation."""
    try:
        cap = int(pltpu.get_tpu_info().vmem_capacity_bytes)
    except Exception:
        cap = 64 * 1024 * 1024                     # conservative fallback
    limit = min(cap // 2, 64 * 1024 * 1024)        # 64 MiB v5e/v6e, 32 MiB v7x
    budget = (limit * 3) // 4                      # headroom for temporaries
    return limit, budget


def _plan_row_tiles(n_rows, c_in, c_out, budget_bytes):
    """Balanced (n_tiles, rows_per_tile) for the (rows, 128) spatial layout."""
    # Double-buffered f32 bytes per sublane row across all streams:
    #   x (2*C_in rows-planes) + weight (C_out) + out (2*C_out); lanes packed.
    per_row = 2 * (2 * c_in + c_out + 2 * c_out) * _LANE * 4
    tr_max = max(_SUBLANE, (budget_bytes // per_row) // _SUBLANE * _SUBLANE)
    rows8 = _round_up(max(n_rows, 1), _SUBLANE)
    n_tiles = _cdiv(rows8, tr_max)
    # v7x has 2 TensorCores; keep >=2 spatial tiles when there is enough work.
    if n_tiles == 1 and rows8 >= 2 * _SUBLANE:
        n_tiles = 2
    tr = _round_up(_cdiv(rows8, n_tiles), _SUBLANE)   # <= tr_max by construction
    return n_tiles, tr


def _fourier_conv_mix_kernel(x_ref, w_ref, b_ref, o_ref):
    """C_out != C_in: `one` (all-ones 1x1x1 conv) == sum over input channels."""
    c_in = x_ref.shape[1] // 2
    c_out = o_ref.shape[1] // 2
    x = x_ref[0]                                   # (2*C_in, TR, 128)
    re = jnp.sum(x[:c_in], axis=0, keepdims=True)  # (1, TR, 128) — VPU adds
    im = jnp.sum(x[c_in:], axis=0, keepdims=True)
    w = w_ref[...]                                 # (C_out, TR, 128)
    o_ref[0, :c_out] = re * w + b_ref[...]         # real plane gets the bias
    o_ref[0, c_out:] = im * w


def _fourier_conv_same_kernel(x_ref, w_ref, b_ref, o_ref):
    """C_out == C_in: `one` is None, purely per-channel elementwise."""
    c = o_ref.shape[1] // 2
    x = x_ref[0]                                   # (2*C, TR, 128)
    w = w_ref[...]                                 # (C, TR, 128)
    o_ref[0, :c] = x[:c] * w + b_ref[...]
    o_ref[0, c:] = x[c:] * w


def fourier_conv3d_pallas(x, weight, bias=None, *, padding=None,
                          pre_fft=True, post_ifft=False):
    """Forward pass of lightorch FourierConv3d.

    x:      (B, C_in, D, H, W) real (or complex if pre_fft=False)
    weight: (C_out, Kd, Kh, Kw) real; kernel_size == (padded) spatial dims
    bias:   (C_out,) real or None
    """
    if pre_fft:
        # TODO(synk): fftn has no clean Pallas equivalent; computed in plain JAX.
        xf = jnp.fft.fftn(x, axes=(-3, -2, -1))
    else:
        xf = x.astype(jnp.complex64)

    if padding is not None:
        pd, ph, pw = padding
        xf = jnp.pad(xf, ((0, 0), (0, 0), (pd, pd), (ph, ph), (pw, pw)))

    B, C_in, D, H, W = xf.shape
    C_out = weight.shape[0]
    assert weight.shape[1:] == (D, H, W), (
        "kernel_size must equal the (padded) spatial dims for Fourier conv")
    S = D * H * W

    # ---- layout: spatial -> (rows, 128); real/imag stacked as leading channels
    # TODO(synk): complex64<->f32 bitcast is unsupported; the split is one
    # wrapper-side pass of HBM traffic that cannot be fused into the kernel.
    x_ri = jnp.stack(
        [jnp.real(xf).astype(jnp.float32), jnp.imag(xf).astype(jnp.float32)],
        axis=1).reshape(B, 2 * C_in, S)            # [re-channels | im-channels]
    w_flat = weight.astype(jnp.float32).reshape(C_out, S)
    if bias is None:
        bias = jnp.zeros((C_out,), jnp.float32)
    b3 = bias.astype(jnp.float32).reshape(C_out, 1, 1)

    vmem_limit, vmem_budget = _vmem_plan()
    n_rows = _cdiv(S, _LANE)
    n_tiles, TR = _plan_row_tiles(n_rows, C_in, C_out, vmem_budget)
    R_pad = n_tiles * TR
    Lp = R_pad * _LANE
    if Lp != S:
        x_ri = jnp.pad(x_ri, ((0, 0), (0, 0), (0, Lp - S)))
        w_flat = jnp.pad(w_flat, ((0, 0), (0, Lp - S)))
    x_ri = x_ri.reshape(B, 2 * C_in, R_pad, _LANE)
    w4 = w_flat.reshape(C_out, R_pad, _LANE)

    kernel = (_fourier_conv_same_kernel if C_out == C_in
              else _fourier_conv_mix_kernel)

    grid_spec = pltpu.PrefetchScalarGridSpec(
        num_scalar_prefetch=0,
        grid=(n_tiles, B),                          # batch innermost: weight tile reused
        in_specs=[
            pl.BlockSpec((1, 2 * C_in, TR, _LANE), lambda t, b: (b, 0, t, 0)),
            pl.BlockSpec((C_out, TR, _LANE), lambda t, b: (0, t, 0)),
            pl.BlockSpec((C_out, 1, 1), lambda t, b: (0, 0, 0)),   # tiny, resident
        ],
        out_specs=pl.BlockSpec((1, 2 * C_out, TR, _LANE),
                               lambda t, b: (b, 0, t, 0)),
    )

    mix_flops = 0 if C_out == C_in else 2 * max(C_in - 1, 0)
    cost = pl.CostEstimate(
        flops=int(B * Lp * (3 * C_out + mix_flops)),
        transcendentals=0,
        bytes_accessed=int(4 * (B * 2 * C_in * Lp + C_out * Lp
                                + B * 2 * C_out * Lp + C_out)))

    out_ri = pl.pallas_call(
        kernel,
        out_shape=jax.ShapeDtypeStruct((B, 2 * C_out, R_pad, _LANE), jnp.float32),
        grid_spec=grid_spec,
        compiler_params=pltpu.CompilerParams(
            dimension_semantics=("parallel", "parallel"),
            vmem_limit_bytes=vmem_limit),
        cost_estimate=cost,
    )(x_ri, w4, b3)

    # Bias lands in the zero-padded real tail (w==0 there); the slice removes it.
    out_ri = out_ri.reshape(B, 2, C_out, Lp)[..., :S]
    out = jax.lax.complex(out_ri[:, 0], out_ri[:, 1]).reshape(B, C_out, D, H, W)
    if post_ifft:
        out = jnp.fft.ifftn(out, axes=(-3, -2, -1))
    return out


def init_fourier_conv3d_params(key, in_channels, out_channels, kernel_size):
    """Deterministic init matching the PyTorch module's shapes / init scheme.

    weight: (C_out, Kd, Kh, Kw), kaiming_uniform_(a=sqrt(5)) bounds.
    bias:   (C_out,), uniform(-1/sqrt(fan_in), 1/sqrt(fan_in)).
    PyTorch fan_in for a (C_out, Kd, Kh, Kw) tensor is Kd * Kh * Kw.
    """
    kd, kh, kw = kernel_size
    fan_in = kd * kh * kw
    gain = math.sqrt(2.0 / (1.0 + 5.0))                # leaky_relu gain, a=sqrt(5)
    bound_w = gain * math.sqrt(3.0 / fan_in)
    k_w, k_b = jax.random.split(key)
    weight = jax.random.uniform(k_w, (out_channels, kd, kh, kw), jnp.float32,
                                -bound_w, bound_w)
    bound_b = 1.0 / math.sqrt(fan_in)
    bias = jax.random.uniform(k_b, (out_channels,), jnp.float32,
                              -bound_b, bound_b)
    return weight, bias


if __name__ == "__main__":
    key = jax.random.PRNGKey(0)
    k_x1, k_p1, k_x2, k_p2, k_x3, k_p3 = jax.random.split(key, 6)

    # ---- test 1: channel-mixing path (C_out != C_in), no padding ----
    B, C_in, C_out = 2, 4, 8
    D = H = W = 8                                      # kernel_size == spatial dims
    x = jax.random.normal(k_x1, (B, C_in, D, H, W), jnp.float32)
    weight, bias = init_fourier_conv3d_params(k_p1, C_in, C_out, (D, H, W))

    out = jax.block_until_ready(
        fourier_conv3d_pallas(x, weight, bias, padding=None,
                              pre_fft=True, post_ifft=False))

    xf = jnp.fft.fftn(x, axes=(-3, -2, -1))
    mixed = jnp.sum(xf, axis=1, keepdims=True)         # ones (C_out,C_in,1,1,1) conv
    ref = mixed * weight[None] + bias[None, :, None, None, None]
    assert out.shape == (B, C_out, D, H, W) and out.dtype == jnp.complex64
    assert jnp.allclose(out, ref, atol=1e-3, rtol=1e-3), "mix-path mismatch"

    # ---- test 2: C_out == C_in path, with spatial zero padding ----
    B2, C2 = 2, 4
    D2 = H2 = W2 = 6
    pad = (1, 1, 1)                                    # padded spatial = 8x8x8
    x2 = jax.random.normal(k_x2, (B2, C2, D2, H2, W2), jnp.float32)
    w2, b2 = init_fourier_conv3d_params(k_p2, C2, C2, (D2 + 2, H2 + 2, W2 + 2))

    out2 = jax.block_until_ready(
        fourier_conv3d_pallas(x2, w2, b2, padding=pad,
                              pre_fft=True, post_ifft=False))

    xf2 = jnp.fft.fftn(x2, axes=(-3, -2, -1))
    xf2 = jnp.pad(xf2, ((0, 0), (0, 0), (1, 1), (1, 1), (1, 1)))
    ref2 = xf2 * w2[None] + b2[None, :, None, None, None]
    assert out2.shape == (B2, C2, D2 + 2, H2 + 2, W2 + 2)
    assert jnp.allclose(out2, ref2, atol=1e-3, rtol=1e-3), "same-path mismatch"

    # ---- test 3: larger spatial extent -> multiple row tiles (grid > 1) ----
    B3, C3 = 1, 2
    D3 = H3 = W3 = 16                                  # S=4096 -> 32 rows -> 2 tiles
    x3 = jax.random.normal(k_x3, (B3, C3, D3, H3, W3), jnp.float32)
    w3, b3 = init_fourier_conv3d_params(k_p3, C3, C3, (D3, H3, W3))

    out3 = jax.block_until_ready(
        fourier_conv3d_pallas(x3, w3, b3, padding=None,
                              pre_fft=True, post_ifft=False))

    xf3 = jnp.fft.fftn(x3, axes=(-3, -2, -1))
    ref3 = xf3 * w3[None] + b3[None, :, None, None, None]
    assert out3.shape == (B3, C3, D3, H3, W3)
    assert jnp.allclose(out3, ref3, atol=1e-3, rtol=1e-3), "multi-tile mismatch"

    print("KERNEL_OK")
</pallas_src>

<mosaic_0001>
module attributes {stable_mosaic.version = 11 : i64} {
  func.func @_fourier_conv_mix_kernel(%arg0: i32, %arg1: i32, %arg2: memref<1x8x8x128xf32, #tpu.memory_space<vmem>>, %arg3: memref<8x8x128xf32, #tpu.memory_space<vmem>>, %arg4: memref<8x1x1xf32, #tpu.memory_space<vmem>>, %arg5: memref<1x16x8x128xf32, #tpu.memory_space<vmem>>) attributes {dimension_semantics = [#tpu.dimension_semantics<parallel>, #tpu.dimension_semantics<parallel>], iteration_bounds = array<i64: 1, 2>, scalar_prefetch = 0 : i64, scratch_operands = 0 : i64, tpu.core_type = #tpu.core_type<tc>, window_params = [{transform_indices = @transform_0, window_bounds = array<i64: 1, 8, 8, 128>}, {transform_indices = @transform_1, window_bounds = array<i64: 8, 8, 128>}, {pipeline_mode = #tpu.pipeline_mode<synchronous>, transform_indices = @transform_2, window_bounds = array<i64: 8, 1, 1>}, {transform_indices = @transform_3, window_bounds = array<i64: 1, 16, 8, 128>}]} {
    %c0 = arith.constant 0 : index
    %c0_0 = arith.constant 0 : index
    %c0_1 = arith.constant 0 : index
    %c0_2 = arith.constant 0 : index
    %0 = vector.load %arg2[%c0, %c0_0, %c0_1, %c0_2] : memref<1x8x8x128xf32, #tpu.memory_space<vmem>>, vector<1x8x8x128xf32>
    %1 = vector.shape_cast %0 : vector<1x8x8x128xf32> to vector<8x8x128xf32>
    %2 = vector.extract_strided_slice %1 {offsets = [0, 0, 0], sizes = [4, 8, 128], strides = [1, 1, 1]} : vector<8x8x128xf32> to vector<4x8x128xf32>
    %cst = arith.constant dense<0.000000e+00> : vector<8x128xf32>
    %3 = vector.multi_reduction <add>, %2, %cst [0] : vector<4x8x128xf32> to vector<8x128xf32>
    %4 = vector.shape_cast %3 : vector<8x128xf32> to vector<1x8x128xf32>
    %5 = vector.extract_strided_slice %1 {offsets = [4, 0, 0], sizes = [4, 8, 128], strides = [1, 1, 1]} : vector<8x8x128xf32> to vector<4x8x128xf32>
    %cst_3 = arith.constant dense<0.000000e+00> : vector<8x128xf32>
    %6 = vector.multi_reduction <add>, %5, %cst_3 [0] : vector<4x8x128xf32> to vector<8x128xf32>
    %7 = vector.shape_cast %6 : vector<8x128xf32> to vector<1x8x128xf32>
    %c0_4 = arith.constant 0 : index
    %c0_5 = arith.constant 0 : index
    %c0_6 = arith.constant 0 : index
    %8 = vector.load %arg3[%c0_4, %c0_5, %c0_6] : memref<8x8x128xf32, #tpu.memory_space<vmem>>, vector<8x8x128xf32>
    %9 = vector.broadcast %4 : vector<1x8x128xf32> to vector<8x8x128xf32>
    %10 = arith.mulf %9, %8 : vector<8x8x128xf32>
    %c0_7 = arith.constant 0 : index
    %c0_8 = arith.constant 0 : index
    %c0_9 = arith.constant 0 : index
    %11 = vector.load %arg4[%c0_7, %c0_8, %c0_9] : memref<8x1x1xf32, #tpu.memory_space<vmem>>, vector<8x1x1xf32>
    %12 = vector.broadcast %11 : vector<8x1x1xf32> to vector<8x8x128xf32>
    %13 = arith.addf %10, %12 : vector<8x8x128xf32>
    %c0_10 = arith.constant 0 : index
    %c0_11 = arith.constant 0 : index
    %c0_12 = arith.constant 0 : index
    %c0_13 = arith.constant 0 : index
    %14 = vector.load %arg5[%c0_10, %c0_11, %c0_12, %c0_13] : memref<1x16x8x128xf32, #tpu.memory_space<vmem>>, vector<1x8x8x128xf32>
    %15 = vector.shape_cast %14 : vector<1x8x8x128xf32> to vector<8x8x128xf32>
    %16 = vector.shape_cast %13 : vector<8x8x128xf32> to vector<1x8x8x128xf32>
    tpu.vector_store %arg5[%c0_10, %c0_11, %c0_12, %c0_13], %16 {strides = array<i32>} : memref<1x16x8x128xf32, #tpu.memory_space<vmem>>, vector<1x8x8x128xf32>,
    %17 = vector.broadcast %7 : vector<1x8x128xf32> to vector<8x8x128xf32>
    %18 = arith.mulf %17, %8 : vector<8x8x128xf32>
    %c0_14 = arith.constant 0 : index
    %c8 = arith.constant 8 : index
    %c0_15 = arith.constant 0 : index
    %c0_16 = arith.constant 0 : index
    %19 = vector.load %arg5[%c0_14, %c8, %c0_15, %c0_16] : memref<1x16x8x128xf32, #tpu.memory_space<vmem>>, vector<1x8x8x128xf32>
    %20 = vector.shape_cast %19 : vector<1x8x8x128xf32> to vector<8x8x128xf32>
    %21 = vector.shape_cast %18 : vector<8x8x128xf32> to vector<1x8x8x128xf32>
    tpu.vector_store %arg5[%c0_14, %c8, %c0_15, %c0_16], %21 {strides = array<i32>} : memref<1x16x8x128xf32, #tpu.memory_space<vmem>>, vector<1x8x8x128xf32>,
    return
  }
  func.func @transform_0(%arg0: i32, %arg1: i32) -> (i32, i32, i32, i32) {
    %c0_i32 = arith.constant 0 : i32
    %c0_i32_0 = arith.constant 0 : i32
    %c0_i32_1 = arith.constant 0 : i32
    return %arg1, %c0_i32, %arg0, %c0_i32_0 : i32, i32, i32, i32
  }
  func.func @transform_1(%arg0: i32, %arg1: i32) -> (i32, i32, i32) {
    %c0_i32 = arith.constant 0 : i32
    %c0_i32_0 = arith.constant 0 : i32
    %c0_i32_1 = arith.constant 0 : i32
    return %c0_i32, %arg0, %c0_i32_0 : i32, i32, i32
  }
  func.func @transform_2(%arg0: i32, %arg1: i32) -> (i32, i32, i32) {
    %c0_i32 = arith.constant 0 : i32
    %c0_i32_0 = arith.constant 0 : i32
    %c0_i32_1 = arith.constant 0 : i32
    %c0_i32_2 = arith.constant 0 : i32
    return %c0_i32, %c0_i32_0, %c0_i32_1 : i32, i32, i32
  }
  func.func @transform_3(%arg0: i32, %arg1: i32) -> (i32, i32, i32, i32) {
    %c0_i32 = arith.constant 0 : i32
    %c0_i32_0 = arith.constant 0 : i32
    %c0_i32_1 = arith.constant 0 : i32
    return %arg1, %c0_i32, %arg0, %c0_i32_0 : i32, i32, i32, i32
  }
}

</mosaic_0001>

<llo_original>
// kernel: tpu_custom_call.1
$region0: #{tpu_custom_call.1}
  #allocation0 [shape = 'u32[]', space=smem, size = 0x4, offset = 0x4, fixed_abs, tag = 'smem constant byte address 0x4 - core index']
  #allocation1 [shape = 'u32[144,128]{1,0:T(1,128)}', space=vmem, size = 0x12000, scoped, tag = 'internal scratch']
  %s0 = inlined_call_operand.hbm [shape: f32[2,8,8,128], index: 0, kind: input, shape index: {}]
  %s1 = inlined_call_operand.hbm [shape: f32[8,8,128], index: 1, kind: input, shape index: {}]
  %s2 = inlined_call_operand.vmem [shape: f32[8,1,1], index: 2, kind: input, shape index: {}]
  %s3 = inlined_call_operand.hbm [shape: f32[2,16,8,128], index: 3, kind: output, shape index: {}]
  %s4 = sld [smem:[#allocation0]]
  $region53: #{tpu_custom_call.1} parent=0
    _
  %s6 = ssub.s32 1, %s4
  %s7 = scalar_select 0, %s6, %s4
  $region1: #{tpu_custom_call.1} parent=0
    #allocation2 [shape = 'u8[65536]{0}', space=vmem, size = 0x10000, scoped, tag = 'input window, operand 0']
    #allocation3 [shape = 's32[2]{0}', space=sflag, size = 0x8, scoped, tag = 'scoped memory for tpu_custom_call.1']
    #allocation4 [shape = 's32[2]{0}', space=sflag, size = 0x8, scoped, tag = 'scoped memory for tpu_custom_call.1']
    #allocation5 [shape = 'u8[32768]{0}', space=vmem, size = 0x8000, scoped, tag = 'input window, operand 1, single buffered']
    #allocation6 [shape = 's32[1]{0}', space=sflag, size = 0x4, scoped, tag = 'scoped memory for tpu_custom_call.1']
    #allocation7 [shape = 'u8[131072]{0}', space=vmem, size = 0x20000, scoped, tag = 'output window, operand 0']
    %8 = vsyncpa [#allocation3], 0
    %s9 = scalar_lea.sflag [#allocation3], 1
    %10 = vsyncpa %s9, 0
    %11 = vsyncpa [#allocation6], 0
    %12 = vsyncpa [#allocation4], 0
    %s13 = scalar_lea.sflag [#allocation4], 1
    %14 = vsyncpa %s13, 0
    loop: start=0, step=1, limit=4
    $region2: #{tpu_custom_call.1} parent=1 // loop_pre_header
      _
    $region3: #{tpu_custom_call.1} parent=1 // loop_header
      %s16 = sphi 0, %s20
      %p17 = scmp.ge.s32.totalorder %s16, 4
      %s23 = sphi 0, %s35
      %s24 = sphi 0, %s31
      %s25 = sphi 0, %s23
      %s26 = sphi 0, %s24
      %s27 = sphi 0, %s25
      %s28 = sphi 0, %s26
      %s40 = sphi 0, %s42
      %s43 = sphi 0, %s40
      %s44 = sphi 0, %s43
      %s60 = sphi 0, %s44
      %s66 = sphi 0, %s68
      %s69 = sphi 0, %s66
      %s70 = sphi 0, %s69
      %s86 = sphi 0, %s70
      %s90 = sphi 0, %s90
      %s92 = sphi 0, %s90
      %s93 = sphi 0, %s92
      %s107 = sphi 0, %s93
      %s115 = sphi 0, %s117
      %s118 = sphi 0, %s115
      %s119 = sphi 0, %s118
      %s135 = sphi 0, %s119
    $region4: #{tpu_custom_call.1} parent=1 // loop_header_branch
      %19 = sbr.rel (%p17) target = $region8
    $region5: #{tpu_custom_call.1} parent=1 // loop_body
      %s21 = ssub.s32 %s16, 1
      %s22 = ssub.s32 %s16, 2
      %s29 = sadd.s32 1, %s24
      %p30 = scmp.ge.s32.totalorder %s29, 2
      %s31 = scalar_select %p30, 0, %s29
      %s32 = sadd.s32 1, %s23
      %s33 = scalar_select %p30, %s32, %s23
      %p34 = scmp.ge.s32.totalorder %s33, 1
      %s35 = scalar_select %p34, 0, %s33
      %s36 = ssub.s32 %s24, %s31
      %s37 = ssub.s32 %s23, %s35
      %s38 = sor.u32 %s36, %s37
      %p39 = scmp.eq.s32.totalorder %s38, 0
      %s41 = sadd.s32 %s40, 1
      %s42 = scalar_select %p39, %s40, %s41
      %p45 = pneg %p39
      %p46 = scmp.eq.s32.totalorder %s16, 1
      %p47 = por %p45, %p46
      %p48 = scmp.ne.s32.totalorder %s40, %s43
      %p49 = scmp.eq.s32.totalorder %s16, 0
      %p50 = por %p48, %p49
      %p51 = scmp.ne.s32.totalorder %s40, %s43
      %p52 = scmp.eq.s32.totalorder %s21, 1
      %p53 = por %p51, %p52
      %p54 = scmp.ne.s32.totalorder %s43, %s44
      %p55 = scmp.eq.s32.totalorder %s21, 0
      %p56 = por %p54, %p55
      %p57 = scmp.ne.s32.totalorder %s43, %s44
      %p58 = scmp.eq.s32.totalorder %s22, 1
      %p59 = por %p57, %p58
      %p61 = scmp.ne.s32.totalorder %s44, %s60
      %p62 = scmp.eq.s32.totalorder %s22, 0
      %p63 = por %p61, %p62
      %s64 = ssub.s32 %s23, %s35
      %p65 = scmp.eq.s32.totalorder %s64, 0
      %s67 = sadd.s32 %s66, 1
      %s68 = scalar_select %p65, %s66, %s67
      %p71 = pneg %p65
      %p72 = scmp.eq.s32.totalorder %s16, 1
      %p73 = por %p71, %p72
      %p74 = scmp.ne.s32.totalorder %s66, %s69
      %p75 = scmp.eq.s32.totalorder %s16, 0
      %p76 = por %p74, %p75
      %p77 = scmp.ne.s32.totalorder %s66, %s69
      %p78 = scmp.eq.s32.totalorder %s21, 1
      %p79 = por %p77, %p78
      %p80 = scmp.ne.s32.totalorder %s69, %s70
      %p81 = scmp.eq.s32.totalorder %s21, 0
      %p82 = por %p80, %p81
      %p83 = scmp.ne.s32.totalorder %s69, %s70
      %p84 = scmp.eq.s32.totalorder %s22, 1
      %p85 = por %p83, %p84
      %p87 = scmp.ne.s32.totalorder %s70, %s86
      %p88 = scmp.eq.s32.totalorder %s22, 0
      %p89 = por %p87, %p88
      %s91 = sadd.s32 %s90, 1
      %p94 = scmp.eq.s32.totalorder %s16, 1
      %p95 = scmp.ne.s32.totalorder %s90, %s92
      %p96 = scmp.eq.s32.totalorder %s16, 0
      %p97 = por %p95, %p96
      %p98 = scmp.ne.s32.totalorder %s90, %s92
      %p99 = scmp.eq.s32.totalorder %s21, 1
      %p100 = por %p98, %p99
      %p101 = scmp.ne.s32.totalorder %s92, %s93
      %p102 = scmp.eq.s32.totalorder %s21, 0
      %p103 = por %p101, %p102
      %p104 = scmp.ne.s32.totalorder %s92, %s93
      %p105 = scmp.eq.s32.totalorder %s22, 1
      %p106 = por %p104, %p105
      %p108 = scmp.ne.s32.totalorder %s93, %s107
      %p109 = scmp.eq.s32.totalorder %s22, 0
      %p110 = por %p108, %p109
      %s111 = ssub.s32 %s24, %s31
      %s112 = ssub.s32 %s23, %s35
      %s113 = sor.u32 %s111, %s112
      %p114 = scmp.eq.s32.totalorder %s113, 0
      %s116 = sadd.s32 %s115, 1
      %s117 = scalar_select %p114, %s115, %s116
      %p120 = pneg %p114
      %p121 = scmp.eq.s32.totalorder %s16, 1
      %p122 = por %p120, %p121
      %p123 = scmp.ne.s32.totalorder %s115, %s118
      %p124 = scmp.eq.s32.totalorder %s16, 0
      %p125 = por %p123, %p124
      %p126 = scmp.ne.s32.totalorder %s115, %s118
      %p127 = scmp.eq.s32.totalorder %s21, 1
      %p128 = por %p126, %p127
      %p129 = scmp.ne.s32.totalorder %s118, %s119
      %p130 = scmp.eq.s32.totalorder %s21, 0
      %p131 = por %p129, %p130
      %p132 = scmp.ne.s32.totalorder %s118, %s119
      %p133 = scmp.eq.s32.totalorder %s22, 1
      %p134 = por %p132, %p133
      %p136 = scmp.ne.s32.totalorder %s119, %s135
      %p137 = scmp.eq.s32.totalorder %s22, 0
      %p138 = por %p136, %p137
      %p139 = scmp.le.s32.totalorder 1, %s16
      %p140 = scmp.lt.s32.totalorder %s16, 3
      %p141 = pnand %p139, %p140
      %p142 = pneg %p141
      // Predicated region
      $region9: #{tpu_custom_call.1} parent=5 // pred_check
        _
      $region10: #{tpu_custom_call.1} parent=5 // pred_check_branch
        %144 = sbr.rel (%p141) target = $region12
      $region11: #{tpu_custom_call.1} parent=5 // pred_region
        %s145 = ssub.s32 %s16, 1
        // Predicated region
        $region13: #{tpu_custom_call.1} parent=11 // pred_check
          %p146 = pneg %p82
        $region14: #{tpu_custom_call.1} parent=11 // pred_check_branch
          %148 = sbr.rel (%p146) target = $region16
        $region15: #{tpu_custom_call.1} parent=11 // pred_region
          %s150 = ssub.s32 1024, 1024
          %151 = vsyncadd [#allocation6], %s150
          %s152 = smul.addr %s25, 128
          %s153 = scalar_lea.hbm %s1, %s152
          %s154 = sshll.u32 [#allocation5], 4
          %s155 = int_to_ptr.vmem [resolvable:$true] %s154
          %160 = dma.hbm_to_vmem [thread:$0]  %s153, 1024, %s155, [#allocation6], 128, 128, 8
        $region16: #{tpu_custom_call.1} parent=11 // pred_fallthru
          _
        // Predicated region
        $region17: #{tpu_custom_call.1} parent=11 // pred_check
          %p161 = pneg %p103
        $region18: #{tpu_custom_call.1} parent=11 // pred_check_branch
          %163 = sbr.rel (%p161) target = $region20
        $region19: #{tpu_custom_call.1} parent=11 // pred_region
          _
        $region20: #{tpu_custom_call.1} parent=11 // pred_fallthru
          _
      $region12: #{tpu_custom_call.1} parent=5 // pred_fallthru
        _
      %p164 = scmp.lt.s32.totalorder %s16, 2
      // Predicated region
      $region21: #{tpu_custom_call.1} parent=5 // pred_check
        %p165 = pneg %p164
      $region22: #{tpu_custom_call.1} parent=5 // pred_check_branch
        %167 = sbr.rel (%p165) target = $region24
      $region23: #{tpu_custom_call.1} parent=5 // pred_region
        // Predicated region
        $region25: #{tpu_custom_call.1} parent=23 // pred_check
          %p168 = pneg %p50
        $region26: #{tpu_custom_call.1} parent=23 // pred_check_branch
          %170 = sbr.rel (%p168) target = $region28
        $region27: #{tpu_custom_call.1} parent=23 // pred_region
          %s171 = sand.u32 %s40, 1
          %s172 = scalar_lea.sflag [#allocation3], %s171
          %s173 = sand.u32 %s40, 1
          %s174 = smul.addr %s173, 64
          %s175 = scalar_lea.vmem [#allocation2], %s174
          %s177 = ssub.s32 1024, 1024
          %178 = vsyncadd %s172, %s177
          %s179 = smul.addr %s24, 8
          %s180 = sadd.s32 %s23, %s179
          %s181 = smul.addr %s180, 128
          %s182 = scalar_lea.hbm %s0, %s181
          %s183 = sshll.u32 %s175, 4
          %s184 = int_to_ptr.vmem [resolvable:$true] %s183
          %189 = dma.hbm_to_vmem [thread:$0]  %s182, 1024, %s184, %s172, 128, 128, 8
        $region28: #{tpu_custom_call.1} parent=23 // pred_fallthru
          _
      $region24: #{tpu_custom_call.1} parent=5 // pred_fallthru
        _
      %p190 = scmp.le.s32.totalorder 1, %s16
      %p191 = scmp.lt.s32.totalorder %s16, 3
      %p192 = pnand %p190, %p191
      %p193 = pneg %p192
      // Predicated region
      $region29: #{tpu_custom_call.1} parent=5 // pred_check
        _
      $region30: #{tpu_custom_call.1} parent=5 // pred_check_branch
        %195 = sbr.rel (%p192) target = $region32
      $region31: #{tpu_custom_call.1} parent=5 // pred_region
        %s196 = ssub.s32 %s16, 1
        %s197 = sand.u32 %s43, 1
        %s198 = scalar_lea.sflag [#allocation3], %s197
        %s199 = sand.u32 %s43, 1
        %s200 = smul.addr %s199, 64
        %s201 = scalar_lea.vmem [#allocation2], %s200
        // Predicated region
        $region33: #{tpu_custom_call.1} parent=31 // pred_check
          %p202 = pneg %p56
        $region34: #{tpu_custom_call.1} parent=31 // pred_check_branch
          %204 = sbr.rel (%p202) target = $region36
        $region35: #{tpu_custom_call.1} parent=31 // pred_region
          %205 = dma.done %s198, 1024
        $region36: #{tpu_custom_call.1} parent=31 // pred_fallthru
          _
        // Predicated region
        $region37: #{tpu_custom_call.1} parent=31 // pred_check
          %p206 = pneg %p82
        $region38: #{tpu_custom_call.1} parent=31 // pred_check_branch
          %208 = sbr.rel (%p206) target = $region40
        $region39: #{tpu_custom_call.1} parent=31 // pred_region
          %209 = dma.done [#allocation6], 1024
        $region40: #{tpu_custom_call.1} parent=31 // pred_fallthru
          _
        %s210 = sand.u32 %s43, 1
        %s211 = scalar_lea.sflag [#allocation3], %s210
        %s212 = sand.u32 %s43, 1
        %s213 = smul.addr %s212, 64
        %s214 = scalar_lea.vmem [#allocation2], %s213
        %p215 = pneg %p56
        %p216 = pneg %p53
        %p217 = pneg %p82
        %p218 = pneg %p79
        %p219 = pneg %p103
        %p220 = pneg %p100
        %p221 = pneg %p131
        %p222 = pneg %p128
        %s223 = sand.u32 %s118, 1
        %s224 = scalar_lea.sflag [#allocation4], %s223
        %s225 = sand.u32 %s118, 1
        %s226 = smul.addr %s225, 128
        %s227 = scalar_lea.vmem [#allocation7], %s226
        %v228 = vld [vmem:[%s201] sm:$0xff]
        %v229 = vld [vmem:[%s201 + $0x8] sm:$0xff]
        %v230 = vld [vmem:[%s201 + $0x10] sm:$0xff]
        %v231 = vld [vmem:[%s201 + $0x18] sm:$0xff]
        %v232 = vld [vmem:[%s201 + $0x20] sm:$0xff]
        %v233 = vld [vmem:[%s201 + $0x28] sm:$0xff]
        %v234 = vld [vmem:[%s201 + $0x30] sm:$0xff]
        %v235 = vld [vmem:[%s201 + $0x38] sm:$0xff]
        %v236 = vadd.f32 %v228, %v229
        %v237 = vadd.f32 %v236, %v230
        %v238 = vadd.f32 %v237, %v231
        %v239 = vadd.f32 %v232, %v233
        %v240 = vadd.f32 %v239, %v234
        %v241 = vadd.f32 %v240, %v235
        %v242 = vld [vmem:[#allocation5] sm:$0xff]
        %v243 = vld [vmem:[#allocation5 + $0x8] sm:$0xff]
        %v244 = vld [vmem:[#allocation5 + $0x10] sm:$0xff]
        %v245 = vld [vmem:[#allocation5 + $0x18] sm:$0xff]
        %v246 = vld [vmem:[#allocation5 + $0x20] sm:$0xff]
        %v247 = vld [vmem:[#allocation5 + $0x28] sm:$0xff]
        %v248 = vld [vmem:[#allocation5 + $0x30] sm:$0xff]
        %v249 = vld [vmem:[#allocation5 + $0x38] sm:$0xff]
        %v250 = vmul.f32 %v238, %v242
        %v251 = vmul.f32 %v238, %v243
        %v252 = vmul.f32 %v238, %v244
        %v253 = vmul.f32 %v238, %v245
        %v254 = vmul.f32 %v238, %v246
        %v255 = vmul.f32 %v238, %v247
        %v256 = vmul.f32 %v238, %v248
        %v257 = vmul.f32 %v238, %v249
        %v258 = vld [vmem:[%s2] sm:$0x1]
        %v259 = vld [vmem:[%s2 + $0x1] sm:$0x1]
        %v260 = vld [vmem:[%s2 + $0x2] sm:$0x1]
        %v261 = vld [vmem:[%s2 + $0x3] sm:$0x1]
        %v262 = vld [vmem:[%s2 + $0x4] sm:$0x1]
        %v263 = vld [vmem:[%s2 + $0x5] sm:$0x1]
        %v264 = vld [vmem:[%s2 + $0x6] sm:$0x1]
        %v265 = vld [vmem:[%s2 + $0x7] sm:$0x1]
        %v274 = vlaneseq
        %v275 = vshrl.u32 %v274, 7
        %v276 = vsub.s32 0, %v275
        %v277 = vrot.slane %v258, %v276
        %v278 = vlaneseq
        %v279 = vshrl.u32 %v278, 7
        %v280 = vsub.s32 0, %v279
        %v281 = vrot.slane %v259, %v280
        %v282 = vlaneseq
        %v283 = vshrl.u32 %v282, 7
        %v284 = vsub.s32 0, %v283
        %v285 = vrot.slane %v260, %v284
        %v286 = vlaneseq
        %v287 = vshrl.u32 %v286, 7
        %v288 = vsub.s32 0, %v287
        %v289 = vrot.slane %v261, %v288
        %v290 = vlaneseq
        %v291 = vshrl.u32 %v290, 7
        %v292 = vsub.s32 0, %v291
        %v293 = vrot.slane %v262, %v292
        %v294 = vlaneseq
        %v295 = vshrl.u32 %v294, 7
        %v296 = vsub.s32 0, %v295
        %v297 = vrot.slane %v263, %v296
        %v298 = vlaneseq
        %v299 = vshrl.u32 %v298, 7
        %v300 = vsub.s32 0, %v299
        %v301 = vrot.slane %v264, %v300
        %v302 = vlaneseq
        %v303 = vshrl.u32 %v302, 7
        %v304 = vsub.s32 0, %v303
        %v305 = vrot.slane %v265, %v304
        %306 = vset.pattern.permute.xlu0 0
        %307 = vperm.xlu0 %306, %v277
        %v308 = vpop.permute.xlu0 %307
        %310 = vset.pattern.permute.xlu0 0
        %311 = vperm.xlu0 %310, %v281
        %v312 = vpop.permute.xlu0 %311
        %314 = vset.pattern.permute.xlu0 0
        %315 = vperm.xlu0 %314, %v285
        %v316 = vpop.permute.xlu0 %315
        %318 = vset.pattern.permute.xlu0 0
        %319 = vperm.xlu0 %318, %v289
        %v320 = vpop.permute.xlu0 %319
        %322 = vset.pattern.permute.xlu0 0
        %323 = vperm.xlu0 %322, %v293
        %v324 = vpop.permute.xlu0 %323
        %326 = vset.pattern.permute.xlu0 0
        %327 = vperm.xlu0 %326, %v297
        %v328 = vpop.permute.xlu0 %327
        %330 = vset.pattern.permute.xlu0 0
        %331 = vperm.xlu0 %330, %v301
        %v332 = vpop.permute.xlu0 %331
        %334 = vset.pattern.permute.xlu0 0
        %335 = vperm.xlu0 %334, %v305
        %v336 = vpop.permute.xlu0 %335
        %v338 = vadd.f32 %v250, %v308
        %v339 = vadd.f32 %v251, %v312
        %v340 = vadd.f32 %v252, %v316
        %v341 = vadd.f32 %v253, %v320
        %v342 = vadd.f32 %v254, %v324
        %v343 = vadd.f32 %v255, %v328
        %v344 = vadd.f32 %v256, %v332
        %v345 = vadd.f32 %v257, %v336
        %346 = vst [vmem:[%s227] sm:$0xff] %v338
        %347 = vst [vmem:[%s227 + $0x8] sm:$0xff] %v339
        %348 = vst [vmem:[%s227 + $0x10] sm:$0xff] %v340
        %349 = vst [vmem:[%s227 + $0x18] sm:$0xff] %v341
        %350 = vst [vmem:[%s227 + $0x20] sm:$0xff] %v342
        %351 = vst [vmem:[%s227 + $0x28] sm:$0xff] %v343
        %352 = vst [vmem:[%s227 + $0x30] sm:$0xff] %v344
        %353 = vst [vmem:[%s227 + $0x38] sm:$0xff] %v345
        %v354 = vmul.f32 %v241, %v242
        %v355 = vmul.f32 %v241, %v243
        %v356 = vmul.f32 %v241, %v244
        %v357 = vmul.f32 %v241, %v245
        %v358 = vmul.f32 %v241, %v246
        %v359 = vmul.f32 %v241, %v247
        %v360 = vmul.f32 %v241, %v248
        %v361 = vmul.f32 %v241, %v249
        %s362 = scalar_lea.vmem %s227, 64 [#allocation7]
        %363 = vst [vmem:[%s362] sm:$0xff] %v354
        %364 = vst [vmem:[%s362 + $0x8] sm:$0xff] %v355
        %365 = vst [vmem:[%s362 + $0x10] sm:$0xff] %v356
        %366 = vst [vmem:[%s362 + $0x18] sm:$0xff] %v357
        %367 = vst [vmem:[%s362 + $0x20] sm:$0xff] %v358
        %368 = vst [vmem:[%s362 + $0x28] sm:$0xff] %v359
        %369 = vst [vmem:[%s362 + $0x30] sm:$0xff] %v360
        %370 = vst [vmem:[%s362 + $0x38] sm:$0xff] %v361
        %s371 = sand.u32 %s118, 1
        %s372 = scalar_lea.sflag [#allocation4], %s371
        %s373 = sand.u32 %s118, 1
        %s374 = smul.addr %s373, 128
        %s375 = scalar_lea.vmem [#allocation7], %s374
        // Predicated region
        $region41: #{tpu_custom_call.1} parent=31 // pred_check
          %p376 = pneg %p128
        $region42: #{tpu_custom_call.1} parent=31 // pred_check_branch
          %378 = sbr.rel (%p376) target = $region44
        $region43: #{tpu_custom_call.1} parent=31 // pred_region
          %s380 = ssub.s32 2048, 2048
          %381 = vsyncadd %s372, %s380
          %s382 = smul.addr %s26, 16
          %s383 = sadd.s32 %s25, %s382
          %s384 = smul.addr %s383, 128
          %s385 = scalar_lea.hbm %s3, %s384
          %s386 = sshll.u32 %s375, 4
          %s387 = int_to_ptr.vmem [resolvable:$true] %s386
          %392 = dma.vmem_to_hbm [thread:$0]  %s387, 2048, %s385, %s372, 128, 128, 8
        $region44: #{tpu_custom_call.1} parent=31 // pred_fallthru
          _
      $region32: #{tpu_custom_call.1} parent=5 // pred_fallthru
        _
      %p393 = scmp.le.s32.totalorder 2, %s16
      // Predicated region
      $region45: #{tpu_custom_call.1} parent=5 // pred_check
        %p394 = pneg %p393
      $region46: #{tpu_custom_call.1} parent=5 // pred_check_branch
        %396 = sbr.rel (%p394) target = $region48
      $region47: #{tpu_custom_call.1} parent=5 // pred_region
        %s397 = ssub.s32 %s16, 2
        // Predicated region
        $region49: #{tpu_custom_call.1} parent=47 // pred_check
          %p398 = pneg %p134
        $region50: #{tpu_custom_call.1} parent=47 // pred_check_branch
          %400 = sbr.rel (%p398) target = $region52
        $region51: #{tpu_custom_call.1} parent=47 // pred_region
          %s401 = sand.u32 %s119, 1
          %s402 = scalar_lea.sflag [#allocation4], %s401
          %s403 = sand.u32 %s119, 1
          %s404 = smul.addr %s403, 128
          %s405 = scalar_lea.vmem [#allocation7], %s404
          %406 = dma.done %s402, 2048
        $region52: #{tpu_custom_call.1} parent=47 // pred_fallthru
          _
      $region48: #{tpu_custom_call.1} parent=5 // pred_fallthru
        _
    $region6: #{tpu_custom_call.1} parent=1 // loop_footer
      %s20 = sadd.s32 1, %s16
    $region7: #{tpu_custom_call.1} parent=1 // loop_footer_branch
      %15 = sbr.rel target = $region3
    $region8: #{tpu_custom_call.1} parent=1 // loop_exit
      _
    %407 = vsyncpa [#allocation3], 1
    %s408 = scalar_lea.sflag [#allocation3], 1
    %409 = vsyncpa %s408, 1
    %410 = vsyncpa [#allocation6], 1
    %411 = vsyncpa [#allocation4], 1
    %s412 = scalar_lea.sflag [#allocation4], 1
    %413 = vsyncpa %s412, 1

</llo_original>
